<compile_context>
chip_gen: v5e
topology: v5e:2x2
jax: 0.10.0
libtpu: 0.0.40
codegen_flags: <defaults>
</compile_context>

<pallas_src>
import jax
import jax.numpy as jnp
from jax.experimental import pallas as pl
from jax.experimental.pallas import tpu as pltpu

# ----- module configuration (PooledCnnClassifier.__init__ args, small shapes) -----
WINDOW_SIZE = 3
NUM_CNN_LAYERS = 1          # Cnn with num_layers <= 1: single Conv1d(emb, cnn_hidden, ws)
CNN_HIDDEN_DIM = 32
NUM_MLP_LAYERS = 2          # Linear -> ReLU -> Linear
MLP_HIDDEN_DIM = 32
NUM_CLASSES = 3
EMB_DIM = 8                 # len(embeddings[0])
VOCAB = 20
BATCH = 2
MAX_DOC_LEN = 10

LANE = 128
NEG_BIG = -1e30             # sentinel value for invalid windows (finite, dominates the max)


def _round_up(n, m):
    return ((n + m - 1) // m) * m


def pooled_cnn_kernel(ids_ref, wemb_ref, bc_ref, w1_ref, b1_ref, w2_ref, b2_ref, out_ref):
    """Fused (embedding gather + Conv1d) as one multihot matmul + max-pool + 2-layer MLP.

    ids_ref:  (tb, ws, T, 1) int32  shifted token ids: w*V + docs[b, t+w], or a sentinel
                                     row index (-> -1e30 in wemb) for invalid windows.
    wemb_ref: (Kp, Hp) f32          embedding-folded conv weight (+ sentinel rows)
    bc_ref:   (1, Hp)  f32          conv bias
    w1_ref:   (Hp, Mp) f32, b1_ref: (1, Mp)   MLP layer 1
    w2_ref:   (Mp, Cp) f32, b2_ref: (1, Cp)   MLP layer 2
    out_ref:  (tb, Cp) f32          lane-padded logits (full-width vst)
    """
    tb, ws, T, _ = ids_ref.shape
    Kp = wemb_ref.shape[0]

    ids = ids_ref[...]                                            # (tb, ws, T, 1) int32
    iota_k = jax.lax.broadcasted_iota(jnp.int32, (tb, T, Kp), 2)  # lane iota

    # Multi-hot over the combined (window-offset, vocab) axis: pure VPU, ws tiny static loop.
    mh = None
    for w in range(ws):
        hit = (ids[:, w, :, :] == iota_k).astype(jnp.float32)     # (tb, T, Kp)
        mh = hit if mh is None else mh + hit

    # One MXU matmul = embedding gather + full Conv1d (+ mask via sentinel rows).
    conv = jax.lax.dot_general(
        mh, wemb_ref[...],
        dimension_numbers=(((2,), (0,)), ((), ())),
        preferred_element_type=jnp.float32)                       # (tb, T, Hp)
    conv = conv + bc_ref[...][None, :, :]

    # Max-pool over the window/time axis (invalid windows sit at ~-1e30).
    pooled = jnp.max(conv, axis=1)                                # (tb, Hp)

    # MLP head: Linear -> ReLU -> Linear (zero-padded weights keep the math exact).
    h = jnp.dot(pooled, w1_ref[...], preferred_element_type=jnp.float32) + b1_ref[...]
    h = jnp.maximum(h, 0.0)
    out_ref[...] = (jnp.dot(h, w2_ref[...], preferred_element_type=jnp.float32)
                    + b2_ref[...])


def pooled_cnn_forward(docs, doc_lens, embeddings, conv_w, conv_b, w1, b1, w2, b2,
                       *, block_b=None):
    """Tiny int32 / parameter prep in plain JAX; all O(batch) work in the Pallas kernel."""
    B, L = docs.shape
    D, V = embeddings.shape
    H, _, ws = conv_w.shape
    M = w1.shape[1]
    C = w2.shape[1]

    # TODO(synk): the max_doc_len < window_size zero-embedding-pad branch of Cnn.forward is
    # not implemented (not exercised at these shapes).
    assert L >= ws, "max doc length must be >= window size"
    T = L - ws + 1

    K = ws * V + ws                                   # real rows + one sentinel row per shift
    Kp = _round_up(K, LANE)
    Hp = _round_up(H, LANE)
    Mp = _round_up(M, LANE)
    Cp = _round_up(C, LANE)

    # ---- Fold the embedding table into the conv weight: wemb[w*V + v, h] = sum_d emb[d,v]*W[h,d,w]
    wemb = jnp.einsum('dv,hdw->wvh',
                      embeddings.astype(jnp.float32),
                      conv_w.astype(jnp.float32)).reshape(ws * V, H)
    wemb_p = jnp.zeros((Kp, Hp), jnp.float32).at[:ws * V, :H].set(wemb)
    # Sentinel rows (one per window offset): invalid windows hit these -> ~-1e30 before max-pool.
    wemb_p = wemb_p.at[ws * V:ws * V + ws, :].set(NEG_BIG)

    bc_p = jnp.pad(conv_b.reshape(1, H).astype(jnp.float32), ((0, 0), (0, Hp - H)))

    # ---- Window-shifted token ids with the validity mask folded in (all int32, tiny).
    # Cnn.forward: doc_lens = max(ws, l); packed lengths = l - ws + 1  (>= 1 always).
    eff_lens = jnp.maximum(doc_lens, ws) - ws + 1                              # (B,)
    valid = jnp.arange(T)[None, :] < eff_lens[:, None]                         # (B, T)
    ids_win = jnp.stack([docs[:, w:w + T] for w in range(ws)], axis=1)         # (B, ws, T)
    shift = (jnp.arange(ws) * V)[None, :, None]
    sentinel = (ws * V + jnp.arange(ws))[None, :, None]
    ids_shift = jnp.where(valid[:, None, :], ids_win + shift, sentinel)        # (B, ws, T)
    ids_shift = ids_shift.astype(jnp.int32).reshape(B, ws, T, 1)

    # ---- MLP weights, zero-padded to 128 lanes (padded logit lanes sliced away below).
    w1_p = jnp.pad(w1.astype(jnp.float32), ((0, Hp - H), (0, Mp - M)))
    b1_p = jnp.pad(b1.reshape(1, M).astype(jnp.float32), ((0, 0), (0, Mp - M)))
    w2_p = jnp.pad(w2.astype(jnp.float32), ((0, Mp - M), (0, Cp - C)))
    b2_p = jnp.pad(b2.reshape(1, C).astype(jnp.float32), ((0, 0), (0, Cp - C)))

    # ---- Batch tiling: fill MXU rows (<=256/step), multiple of 8 unless it covers the batch.
    if block_b is None:
        tb = B if B <= 256 else 256
    else:
        tb = min(block_b, B)
    if tb < B:
        tb = max(8, (tb // 8) * 8)
    Bp = _round_up(B, tb)
    n_blocks = Bp // tb
    if Bp != B:
        ids_shift = jnp.pad(ids_shift, ((0, Bp - B), (0, 0), (0, 0), (0, 0)))

    grid_spec = pl.GridSpec(
        grid=(n_blocks,),
        in_specs=[
            pl.BlockSpec((tb, ws, T, 1), lambda i: (i, 0, 0, 0)),
            pl.BlockSpec((Kp, Hp), lambda i: (0, 0)),
            pl.BlockSpec((1, Hp), lambda i: (0, 0)),
            pl.BlockSpec((Hp, Mp), lambda i: (0, 0)),
            pl.BlockSpec((1, Mp), lambda i: (0, 0)),
            pl.BlockSpec((Mp, Cp), lambda i: (0, 0)),
            pl.BlockSpec((1, Cp), lambda i: (0, 0)),
        ],
        out_specs=pl.BlockSpec((tb, Cp), lambda i: (i, 0)),
    )

    out_p = pl.pallas_call(
        pooled_cnn_kernel,
        out_shape=jax.ShapeDtypeStruct((Bp, Cp), jnp.float32),
        grid_spec=grid_spec,
        compiler_params=pltpu.CompilerParams(
            dimension_semantics=("parallel",),
            vmem_limit_bytes=32 * 1024 * 1024),
    )(ids_shift, wemb_p, bc_p, w1_p, b1_p, w2_p, b2_p)

    return out_p[:B, :C]


def reference_forward(docs, doc_lens, embeddings, conv_w, conv_b, w1, b1, w2, b2):
    """Plain-JAX replica of the PyTorch forward, for a numerical sanity check."""
    x_emb = jnp.transpose(embeddings[:, docs], (1, 0, 2)).astype(jnp.float32)   # (B, D, L)
    ws = WINDOW_SIZE
    T = x_emb.shape[2] - ws + 1
    conv = jnp.stack(
        [jnp.einsum('bdw,hdw->bh', x_emb[:, :, t:t + ws], conv_w) for t in range(T)],
        axis=1) + conv_b[None, None, :]
    eff_lens = jnp.maximum(doc_lens, ws) - ws + 1
    mask = jnp.arange(T)[None, :] < eff_lens[:, None]
    pooled = jnp.max(jnp.where(mask[:, :, None], conv, -jnp.inf), axis=1)
    h = jax.nn.relu(pooled @ w1 + b1)
    return h @ w2 + b2


if __name__ == "__main__":
    key = jax.random.PRNGKey(0)
    ks = jax.random.split(key, 8)

    # Deterministic synthetic parameters (shapes from the module __init__)
    embeddings = 0.5 * jax.random.normal(ks[0], (EMB_DIM, VOCAB), jnp.float32)
    conv_w = 0.2 * jax.random.normal(ks[1], (CNN_HIDDEN_DIM, EMB_DIM, WINDOW_SIZE), jnp.float32)
    conv_b = 0.1 * jax.random.normal(ks[2], (CNN_HIDDEN_DIM,), jnp.float32)
    w1 = 0.2 * jax.random.normal(ks[3], (CNN_HIDDEN_DIM, MLP_HIDDEN_DIM), jnp.float32)
    b1 = 0.1 * jax.random.normal(ks[4], (1, MLP_HIDDEN_DIM), jnp.float32)
    w2 = 0.2 * jax.random.normal(ks[5], (MLP_HIDDEN_DIM, NUM_CLASSES), jnp.float32)
    b2 = 0.1 * jax.random.normal(ks[6], (1, NUM_CLASSES), jnp.float32)

    # Batch: padded token-id docs + true lengths (sorted descending, as pack_padded requires)
    docs = jax.random.randint(ks[7], (BATCH, MAX_DOC_LEN), 0, VOCAB, jnp.int32)
    doc_lens = jnp.array([MAX_DOC_LEN, 6], jnp.int32)

    out = pooled_cnn_forward(docs, doc_lens, embeddings, conv_w, conv_b, w1, b1, w2, b2)
    out = jax.block_until_ready(out)

    ref = reference_forward(docs, doc_lens, embeddings, conv_w, conv_b, w1, b1, w2, b2)
    assert out.shape == (BATCH, NUM_CLASSES)
    assert jnp.allclose(out, ref, rtol=1e-3, atol=1e-3), (out, ref)

    print("KERNEL_OK")
</pallas_src>

<mosaic_0001>
module attributes {stable_mosaic.version = 11 : i64} {
  func.func @pooled_cnn_kernel(%arg0: i32, %arg1: memref<2x3x8x1xi32, #tpu.memory_space<vmem>>, %arg2: memref<128x128xf32, #tpu.memory_space<vmem>>, %arg3: memref<1x128xf32, #tpu.memory_space<vmem>>, %arg4: memref<128x128xf32, #tpu.memory_space<vmem>>, %arg5: memref<1x128xf32, #tpu.memory_space<vmem>>, %arg6: memref<128x128xf32, #tpu.memory_space<vmem>>, %arg7: memref<1x128xf32, #tpu.memory_space<vmem>>, %arg8: memref<2x128xf32, #tpu.memory_space<vmem>>) attributes {dimension_semantics = [#tpu.dimension_semantics<parallel>], iteration_bounds = array<i64: 1>, scalar_prefetch = 0 : i64, scratch_operands = 0 : i64, tpu.core_type = #tpu.core_type<tc>, window_params = [{transform_indices = @transform_0, window_bounds = array<i64: 2, 3, 8, 1>}, {pipeline_mode = #tpu.pipeline_mode<synchronous>, transform_indices = @transform_1, window_bounds = array<i64: 128, 128>}, {pipeline_mode = #tpu.pipeline_mode<synchronous>, transform_indices = @transform_2, window_bounds = array<i64: 1, 128>}, {pipeline_mode = #tpu.pipeline_mode<synchronous>, transform_indices = @transform_3, window_bounds = array<i64: 128, 128>}, {pipeline_mode = #tpu.pipeline_mode<synchronous>, transform_indices = @transform_4, window_bounds = array<i64: 1, 128>}, {pipeline_mode = #tpu.pipeline_mode<synchronous>, transform_indices = @transform_5, window_bounds = array<i64: 128, 128>}, {pipeline_mode = #tpu.pipeline_mode<synchronous>, transform_indices = @transform_6, window_bounds = array<i64: 1, 128>}, {transform_indices = @transform_7, window_bounds = array<i64: 2, 128>}]} {
    %c0 = arith.constant 0 : index
    %c0_0 = arith.constant 0 : index
    %c0_1 = arith.constant 0 : index
    %c0_2 = arith.constant 0 : index
    %0 = vector.load %arg1[%c0, %c0_0, %c0_1, %c0_2] : memref<2x3x8x1xi32, #tpu.memory_space<vmem>>, vector<2x3x8x1xi32>
    %1 = tpu.iota {dimensions = array<i32: 2>} : vector<2x8x128xi32>
    %2 = vector.extract_strided_slice %0 {offsets = [0, 0, 0, 0], sizes = [2, 1, 8, 1], strides = [1, 1, 1, 1]} : vector<2x3x8x1xi32> to vector<2x1x8x1xi32>
    %3 = vector.shape_cast %2 : vector<2x1x8x1xi32> to vector<2x8x1xi32>
    %4 = vector.broadcast %3 : vector<2x8x1xi32> to vector<2x8x128xi32>
    %5 = arith.cmpi eq, %4, %1 : vector<2x8x128xi32>
    %6 = arith.extui %5 : vector<2x8x128xi1> to vector<2x8x128xi32>
    %7 = arith.sitofp %6 : vector<2x8x128xi32> to vector<2x8x128xf32>
    %8 = vector.extract_strided_slice %0 {offsets = [0, 1, 0, 0], sizes = [2, 1, 8, 1], strides = [1, 1, 1, 1]} : vector<2x3x8x1xi32> to vector<2x1x8x1xi32>
    %9 = vector.shape_cast %8 : vector<2x1x8x1xi32> to vector<2x8x1xi32>
    %10 = vector.broadcast %9 : vector<2x8x1xi32> to vector<2x8x128xi32>
    %11 = arith.cmpi eq, %10, %1 : vector<2x8x128xi32>
    %12 = arith.extui %11 : vector<2x8x128xi1> to vector<2x8x128xi32>
    %13 = arith.sitofp %12 : vector<2x8x128xi32> to vector<2x8x128xf32>
    %14 = arith.addf %7, %13 : vector<2x8x128xf32>
    %15 = vector.extract_strided_slice %0 {offsets = [0, 2, 0, 0], sizes = [2, 1, 8, 1], strides = [1, 1, 1, 1]} : vector<2x3x8x1xi32> to vector<2x1x8x1xi32>
    %16 = vector.shape_cast %15 : vector<2x1x8x1xi32> to vector<2x8x1xi32>
    %17 = vector.broadcast %16 : vector<2x8x1xi32> to vector<2x8x128xi32>
    %18 = arith.cmpi eq, %17, %1 : vector<2x8x128xi32>
    %19 = arith.extui %18 : vector<2x8x128xi1> to vector<2x8x128xi32>
    %20 = arith.sitofp %19 : vector<2x8x128xi32> to vector<2x8x128xf32>
    %21 = arith.addf %14, %20 : vector<2x8x128xf32>
    %c0_3 = arith.constant 0 : index
    %c0_4 = arith.constant 0 : index
    %22 = vector.load %arg2[%c0_3, %c0_4] : memref<128x128xf32, #tpu.memory_space<vmem>>, vector<128x128xf32>
    %cst = arith.constant dense<0.000000e+00> : vector<2x8x128xf32>
    %23 = tpu.matmul %21, %22, %cst {dimension_numbers = #tpu.dot_dimension_numbers<[2], [0], [0, 1], [1], [0, 0, 0, 1, 1, 1], [], []>} : vector<2x8x128xf32>, vector<128x128xf32>, vector<2x8x128xf32> -> vector<2x8x128xf32>
    %c0_5 = arith.constant 0 : index
    %c0_6 = arith.constant 0 : index
    %24 = vector.load %arg3[%c0_5, %c0_6] : memref<1x128xf32, #tpu.memory_space<vmem>>, vector<1x128xf32>
    %25 = vector.shape_cast %24 : vector<1x128xf32> to vector<1x1x128xf32>
    %26 = vector.broadcast %25 : vector<1x1x128xf32> to vector<2x8x128xf32>
    %27 = arith.addf %23, %26 : vector<2x8x128xf32>
    %cst_7 = arith.constant dense<0xFF800000> : vector<2x128xf32>
    %28 = vector.multi_reduction <maximumf>, %27, %cst_7 [1] : vector<2x8x128xf32> to vector<2x128xf32>
    %c0_8 = arith.constant 0 : index
    %c0_9 = arith.constant 0 : index
    %29 = vector.load %arg4[%c0_8, %c0_9] : memref<128x128xf32, #tpu.memory_space<vmem>>, vector<128x128xf32>
    %cst_10 = arith.constant dense<0.000000e+00> : vector<2x128xf32>
    %30 = tpu.matmul %28, %29, %cst_10 {dimension_numbers = #tpu.dot_dimension_numbers<[1], [0], [0], [1], [0, 0, 1, 1], [], []>} : vector<2x128xf32>, vector<128x128xf32>, vector<2x128xf32> -> vector<2x128xf32>
    %c0_11 = arith.constant 0 : index
    %c0_12 = arith.constant 0 : index
    %31 = vector.load %arg5[%c0_11, %c0_12] : memref<1x128xf32, #tpu.memory_space<vmem>>, vector<1x128xf32>
    %32 = vector.broadcast %31 : vector<1x128xf32> to vector<2x128xf32>
    %33 = arith.addf %30, %32 : vector<2x128xf32>
    %cst_13 = arith.constant 0.000000e+00 : f32
    %34 = vector.broadcast %cst_13 : f32 to vector<2x128xf32>
    %35 = arith.maximumf %33, %34 : vector<2x128xf32>
    %c0_14 = arith.constant 0 : index
    %c0_15 = arith.constant 0 : index
    %36 = vector.load %arg6[%c0_14, %c0_15] : memref<128x128xf32, #tpu.memory_space<vmem>>, vector<128x128xf32>
    %cst_16 = arith.constant dense<0.000000e+00> : vector<2x128xf32>
    %37 = tpu.matmul %35, %36, %cst_16 {dimension_numbers = #tpu.dot_dimension_numbers<[1], [0], [0], [1], [0, 0, 1, 1], [], []>} : vector<2x128xf32>, vector<128x128xf32>, vector<2x128xf32> -> vector<2x128xf32>
    %c0_17 = arith.constant 0 : index
    %c0_18 = arith.constant 0 : index
    %38 = vector.load %arg7[%c0_17, %c0_18] : memref<1x128xf32, #tpu.memory_space<vmem>>, vector<1x128xf32>
    %39 = vector.broadcast %38 : vector<1x128xf32> to vector<2x128xf32>
    %40 = arith.addf %37, %39 : vector<2x128xf32>
    %c0_19 = arith.constant 0 : index
    %c0_20 = arith.constant 0 : index
    %41 = vector.load %arg8[%c0_19, %c0_20] : memref<2x128xf32, #tpu.memory_space<vmem>>, vector<2x128xf32>
    tpu.vector_store %arg8[%c0_19, %c0_20], %40 {strides = array<i32>} : memref<2x128xf32, #tpu.memory_space<vmem>>, vector<2x128xf32>,
    return
  }
  func.func @transform_0(%arg0: i32) -> (i32, i32, i32, i32) {
    %c0_i32 = arith.constant 0 : i32
    %c0_i32_0 = arith.constant 0 : i32
    %c0_i32_1 = arith.constant 0 : i32
    %c0_i32_2 = arith.constant 0 : i32
    return %arg0, %c0_i32, %c0_i32_0, %c0_i32_1 : i32, i32, i32, i32
  }
  func.func @transform_1(%arg0: i32) -> (i32, i32) {
    %c0_i32 = arith.constant 0 : i32
    %c0_i32_0 = arith.constant 0 : i32
    %c0_i32_1 = arith.constant 0 : i32
    return %c0_i32, %c0_i32_0 : i32, i32
  }
  func.func @transform_2(%arg0: i32) -> (i32, i32) {
    %c0_i32 = arith.constant 0 : i32
    %c0_i32_0 = arith.constant 0 : i32
    %c0_i32_1 = arith.constant 0 : i32
    return %c0_i32, %c0_i32_0 : i32, i32
  }
  func.func @transform_3(%arg0: i32) -> (i32, i32) {
    %c0_i32 = arith.constant 0 : i32
    %c0_i32_0 = arith.constant 0 : i32
    %c0_i32_1 = arith.constant 0 : i32
    return %c0_i32, %c0_i32_0 : i32, i32
  }
  func.func @transform_4(%arg0: i32) -> (i32, i32) {
    %c0_i32 = arith.constant 0 : i32
    %c0_i32_0 = arith.constant 0 : i32
    %c0_i32_1 = arith.constant 0 : i32
    return %c0_i32, %c0_i32_0 : i32, i32
  }
  func.func @transform_5(%arg0: i32) -> (i32, i32) {
    %c0_i32 = arith.constant 0 : i32
    %c0_i32_0 = arith.constant 0 : i32
    %c0_i32_1 = arith.constant 0 : i32
    return %c0_i32, %c0_i32_0 : i32, i32
  }
  func.func @transform_6(%arg0: i32) -> (i32, i32) {
    %c0_i32 = arith.constant 0 : i32
    %c0_i32_0 = arith.constant 0 : i32
    %c0_i32_1 = arith.constant 0 : i32
    return %c0_i32, %c0_i32_0 : i32, i32
  }
  func.func @transform_7(%arg0: i32) -> (i32, i32) {
    %c0_i32 = arith.constant 0 : i32
    %c0_i32_0 = arith.constant 0 : i32
    return %arg0, %c0_i32 : i32, i32
  }
}

</mosaic_0001>

<llo_original>
// kernel: tpu_custom_call.1
$region0: #{tpu_custom_call.1}
  #allocation0 [shape = 'u32[]', space=smem, size = 0x4, offset = 0x4, fixed_abs, tag = 'smem constant byte address 0x4 - core index']
  #allocation1 [shape = 'u32[72,128]{1,0:T(1,128)}', space=vmem, size = 0x9000, scoped, tag = 'internal scratch']
  %s0 = inlined_call_operand.vmem [shape: s32[2,3,8,1], index: 0, kind: input, shape index: {}]
  %s1 = inlined_call_operand.hbm [shape: f32[128,128], index: 1, kind: input, shape index: {}]
  %s2 = inlined_call_operand.vmem [shape: f32[1,128], index: 2, kind: input, shape index: {}]
  %s3 = inlined_call_operand.hbm [shape: f32[128,128], index: 3, kind: input, shape index: {}]
  %s4 = inlined_call_operand.vmem [shape: f32[1,128], index: 4, kind: input, shape index: {}]
  %s5 = inlined_call_operand.hbm [shape: f32[128,128], index: 5, kind: input, shape index: {}]
  %s6 = inlined_call_operand.vmem [shape: f32[1,128], index: 6, kind: input, shape index: {}]
  %s7 = inlined_call_operand.hbm [shape: f32[2,128], index: 7, kind: output, shape index: {}]
  %s8 = sld [smem:[#allocation0]]
  $region50: #{tpu_custom_call.1} parent=0
    _
  %s10 = ssub.s32 1, %s8
  %s11 = scalar_select 0, %s10, %s8
  $region1: #{tpu_custom_call.1} parent=0
    #allocation2 [shape = 'u8[65536]{0}', space=vmem, size = 0x10000, scoped, tag = 'input window, operand 1, single buffered']
    #allocation3 [shape = 's32[1]{0}', space=sflag, size = 0x4, scoped, tag = 'scoped memory for tpu_custom_call.1']
    #allocation4 [shape = 's32[1]{0}', space=sflag, size = 0x4, scoped, tag = 'scoped memory for tpu_custom_call.1']
    #allocation5 [shape = 'u8[65536]{0}', space=vmem, size = 0x10000, scoped, tag = 'input window, operand 3, single buffered']
    #allocation6 [shape = 's32[1]{0}', space=sflag, size = 0x4, scoped, tag = 'scoped memory for tpu_custom_call.1']
    #allocation7 [shape = 'u8[65536]{0}', space=vmem, size = 0x10000, scoped, tag = 'input window, operand 5, single buffered']
    #allocation8 [shape = 'u8[1024]{0}', space=vmem, size = 0x400, scoped, tag = 'output window, operand 0, single buffered']
    %12 = vsyncpa [#allocation3], 0
    %13 = vsyncpa [#allocation6], 0
    %14 = vsyncpa [#allocation4], 0
    // Predicated region
    $region2: #{tpu_custom_call.1} parent=1 // pred_check
      _
    $region3: #{tpu_custom_call.1} parent=1 // pred_check_branch
      %16 = sbr.rel (0) target = $region5
    $region4: #{tpu_custom_call.1} parent=1 // pred_region
      _
    $region5: #{tpu_custom_call.1} parent=1 // pred_fallthru
      _
    // Predicated region
    $region6: #{tpu_custom_call.1} parent=1 // pred_check
      _
    $region7: #{tpu_custom_call.1} parent=1 // pred_check_branch
      %18 = sbr.rel (0) target = $region9
    $region8: #{tpu_custom_call.1} parent=1 // pred_region
      %20 = vsyncadd [#allocation3], 0
      %s21 = sshll.u32 %s1, 4
      %s22 = int_to_ptr.hbm [resolvable:$true] %s21
      %s23 = sshll.u32 [#allocation2], 4
      %s24 = int_to_ptr.vmem [resolvable:$true] %s23
      %29 = dma.hbm_to_vmem [thread:$0]  %s22, 2048, %s24, [#allocation3], 128, 128, 8
    $region9: #{tpu_custom_call.1} parent=1 // pred_fallthru
      _
    // Predicated region
    $region10: #{tpu_custom_call.1} parent=1 // pred_check
      _
    $region11: #{tpu_custom_call.1} parent=1 // pred_check_branch
      %31 = sbr.rel (0) target = $region13
    $region12: #{tpu_custom_call.1} parent=1 // pred_region
      _
    $region13: #{tpu_custom_call.1} parent=1 // pred_fallthru
      _
    // Predicated region
    $region14: #{tpu_custom_call.1} parent=1 // pred_check
      _
    $region15: #{tpu_custom_call.1} parent=1 // pred_check_branch
      %33 = sbr.rel (0) target = $region17
    $region16: #{tpu_custom_call.1} parent=1 // pred_region
      %35 = vsyncadd [#allocation6], 0
      %s36 = sshll.u32 %s3, 4
      %s37 = int_to_ptr.hbm [resolvable:$true] %s36
      %s38 = sshll.u32 [#allocation5], 4
      %s39 = int_to_ptr.vmem [resolvable:$true] %s38
      %44 = dma.hbm_to_vmem [thread:$0]  %s37, 2048, %s39, [#allocation6], 128, 128, 8
    $region17: #{tpu_custom_call.1} parent=1 // pred_fallthru
      _
    // Predicated region
    $region18: #{tpu_custom_call.1} parent=1 // pred_check
      _
    $region19: #{tpu_custom_call.1} parent=1 // pred_check_branch
      %46 = sbr.rel (0) target = $region21
    $region20: #{tpu_custom_call.1} parent=1 // pred_region
      _
    $region21: #{tpu_custom_call.1} parent=1 // pred_fallthru
      _
    // Predicated region
    $region22: #{tpu_custom_call.1} parent=1 // pred_check
      _
    $region23: #{tpu_custom_call.1} parent=1 // pred_check_branch
      %48 = sbr.rel (0) target = $region25
    $region24: #{tpu_custom_call.1} parent=1 // pred_region
      %50 = vsyncadd [#allocation6], 0
      %s51 = sshll.u32 %s5, 4
      %s52 = int_to_ptr.hbm [resolvable:$true] %s51
      %s53 = sshll.u32 [#allocation7], 4
      %s54 = int_to_ptr.vmem [resolvable:$true] %s53
      %59 = dma.hbm_to_vmem [thread:$0]  %s52, 2048, %s54, [#allocation6], 128, 128, 8
    $region25: #{tpu_custom_call.1} parent=1 // pred_fallthru
      _
    // Predicated region
    $region26: #{tpu_custom_call.1} parent=1 // pred_check
      _
    $region27: #{tpu_custom_call.1} parent=1 // pred_check_branch
      %61 = sbr.rel (0) target = $region29
    $region28: #{tpu_custom_call.1} parent=1 // pred_region
      _
    $region29: #{tpu_custom_call.1} parent=1 // pred_fallthru
      _
    // Predicated region
    $region30: #{tpu_custom_call.1} parent=1 // pred_check
      _
    $region31: #{tpu_custom_call.1} parent=1 // pred_check_branch
      %63 = sbr.rel (0) target = $region33
    $region32: #{tpu_custom_call.1} parent=1 // pred_region
      %65 = dma.done [#allocation3], 2048
    $region33: #{tpu_custom_call.1} parent=1 // pred_fallthru
      _
    // Predicated region
    $region34: #{tpu_custom_call.1} parent=1 // pred_check
      _
    $region35: #{tpu_custom_call.1} parent=1 // pred_check_branch
      %67 = sbr.rel (0) target = $region37
    $region36: #{tpu_custom_call.1} parent=1 // pred_region
      %69 = dma.done [#allocation6], 2048
    $region37: #{tpu_custom_call.1} parent=1 // pred_fallthru
      _
    // Predicated region
    $region38: #{tpu_custom_call.1} parent=1 // pred_check
      _
    $region39: #{tpu_custom_call.1} parent=1 // pred_check_branch
      %71 = sbr.rel (0) target = $region41
    $region40: #{tpu_custom_call.1} parent=1 // pred_region
      %73 = dma.done [#allocation6], 2048
    $region41: #{tpu_custom_call.1} parent=1 // pred_fallthru
      _
    %v74 = vld [vmem:[%s0] sm:$0xff]
    %v75 = vld [vmem:[%s0 + $0x8] sm:$0xff]
    %v76 = vld [vmem:[%s0 + $0x10] sm:$0xff]
    %v77 = vld [vmem:[%s0 + $0x18] sm:$0xff]
    %v78 = vld [vmem:[%s0 + $0x20] sm:$0xff]
    %v79 = vld [vmem:[%s0 + $0x28] sm:$0xff]
    %v80 = vlaneseq
    %v81 = vand.u32 %v80, 127
    %82 = vset.pattern.permute.xlu0 0
    %83 = vperm.xlu0 %82, %v74
    %v84 = vpop.permute.xlu0 %83
    %85 = vset.pattern.permute.xlu0 0
    %86 = vperm.xlu0 %85, %v77
    %v87 = vpop.permute.xlu0 %86
    %vm88 = vcmp.eq.s32.totalorder %v84, %v81
    %vm89 = vcmp.eq.s32.totalorder %v87, %v81
    %v90 = vsel %vm88, 1, 0
    %v91 = vsel %vm89, 1, 0
    %v92 = vcvt.s32.f32 %v90
    %v93 = vcvt.s32.f32 %v91
    %94 = vset.pattern.permute.xlu0 0
    %95 = vperm.xlu0 %94, %v75
    %v96 = vpop.permute.xlu0 %95
    %97 = vset.pattern.permute.xlu0 0
    %98 = vperm.xlu0 %97, %v78
    %v99 = vpop.permute.xlu0 %98
    %vm100 = vcmp.eq.s32.totalorder %v96, %v81
    %vm101 = vcmp.eq.s32.totalorder %v99, %v81
    %v102 = vsel %vm100, 1, 0
    %v103 = vsel %vm101, 1, 0
    %v104 = vcvt.s32.f32 %v102
    %v105 = vcvt.s32.f32 %v103
    %v106 = vadd.f32 %v92, %v104
    %v107 = vadd.f32 %v93, %v105
    %108 = vset.pattern.permute.xlu0 0
    %109 = vperm.xlu0 %108, %v76
    %v110 = vpop.permute.xlu0 %109
    %111 = vset.pattern.permute.xlu0 0
    %112 = vperm.xlu0 %111, %v79
    %v113 = vpop.permute.xlu0 %112
    %vm114 = vcmp.eq.s32.totalorder %v110, %v81
    %vm115 = vcmp.eq.s32.totalorder %v113, %v81
    %v116 = vsel %vm114, 1, 0
    %v117 = vsel %vm115, 1, 0
    %v118 = vcvt.s32.f32 %v116
    %v119 = vcvt.s32.f32 %v117
    %v120 = vadd.f32 %v106, %v118
    %v121 = vadd.f32 %v107, %v119
    %v122 = vld [vmem:[#allocation2] sm:$0xff]
    %v123 = vld [vmem:[#allocation2 + $0x8] sm:$0xff]
    %v124 = vld [vmem:[#allocation2 + $0x10] sm:$0xff]
    %v125 = vld [vmem:[#allocation2 + $0x18] sm:$0xff]
    %v126 = vld [vmem:[#allocation2 + $0x20] sm:$0xff]
    %v127 = vld [vmem:[#allocation2 + $0x28] sm:$0xff]
    %v128 = vld [vmem:[#allocation2 + $0x30] sm:$0xff]
    %v129 = vld [vmem:[#allocation2 + $0x38] sm:$0xff]
    %v130 = vld [vmem:[#allocation2 + $0x40] sm:$0xff]
    %v131 = vld [vmem:[#allocation2 + $0x48] sm:$0xff]
    %v132 = vld [vmem:[#allocation2 + $0x50] sm:$0xff]
    %v133 = vld [vmem:[#allocation2 + $0x58] sm:$0xff]
    %v134 = vld [vmem:[#allocation2 + $0x60] sm:$0xff]
    %v135 = vld [vmem:[#allocation2 + $0x68] sm:$0xff]
    %v136 = vld [vmem:[#allocation2 + $0x70] sm:$0xff]
    %v137 = vld [vmem:[#allocation2 + $0x78] sm:$0xff]
    %v138 = vld [vmem:[%s2] sm:$0x1]
    %v140 = vperm.slane %v138, 0
    %142 = vmatpush.msra.mxu0 %v137
    %143 = vmatpush.msra.mxu0 %v136
    %144 = vmatpush.msra.mxu0 %v135
    %145 = vmatpush.msra.mxu0 %v134
    %146 = vmatpush.msra.mxu0 %v133
    %147 = vmatpush.msra.mxu0 %v132
    %148 = vmatpush.msra.mxu0 %v131
    %149 = vmatpush.msra.mxu0 %v130
    %150 = vmatpush.msra.mxu0 %v129
    %151 = vmatpush.msra.mxu0 %v128
    %152 = vmatpush.msra.mxu0 %v127
    %153 = vmatpush.msra.mxu0 %v126
    %154 = vmatpush.msra.mxu0 %v125
    %155 = vmatpush.msra.mxu0 %v124
    %156 = vmatpush.msra.mxu0 %v123
    %157 = vmatpush.msra.mxu0 %v122
    %158 = vmatmul.f32.gmra.mxu0 %v120
    %v159 = vpop.f32.mrf.mxu0
    %v160 = vadd.f32 %v140, %v159
    %161 = vmatmul.f32.gmra.mxu0 %v121
    %v162 = vpop.f32.mrf.mxu0
    %v163 = vadd.f32 %v140, %v162
    %164 = vdwg.mxu0
    %v165 = vrot.slane %v160, 4
    %v166 = vmax.f32 %v160, %v165
    %v167 = vrot.slane %v166, 2
    %v168 = vmax.f32 %v166, %v167
    %v169 = vrot.slane %v168, 1
    %v170 = vmax.f32 %v168, %v169
    %v171 = vrot.slane %v163, 4
    %v172 = vmax.f32 %v163, %v171
    %v173 = vrot.slane %v172, 2
    %v174 = vmax.f32 %v172, %v173
    %v175 = vrot.slane %v174, 1
    %v176 = vmax.f32 %v174, %v175
    %v177 = vld [vmem:[#allocation5] sm:$0xff]
    %v178 = vld [vmem:[#allocation5 + $0x8] sm:$0xff]
    %v179 = vld [vmem:[#allocation5 + $0x10] sm:$0xff]
    %v180 = vld [vmem:[#allocation5 + $0x18] sm:$0xff]
    %v181 = vld [vmem:[#allocation5 + $0x20] sm:$0xff]
    %v182 = vld [vmem:[#allocation5 + $0x28] sm:$0xff]
    %v183 = vld [vmem:[#allocation5 + $0x30] sm:$0xff]
    %v184 = vld [vmem:[#allocation5 + $0x38] sm:$0xff]
    %v185 = vld [vmem:[#allocation5 + $0x40] sm:$0xff]
    %v186 = vld [vmem:[#allocation5 + $0x48] sm:$0xff]
    %v187 = vld [vmem:[#allocation5 + $0x50] sm:$0xff]
    %v188 = vld [vmem:[#allocation5 + $0x58] sm:$0xff]
    %v189 = vld [vmem:[#allocation5 + $0x60] sm:$0xff]
    %v190 = vld [vmem:[#allocation5 + $0x68] sm:$0xff]
    %v191 = vld [vmem:[#allocation5 + $0x70] sm:$0xff]
    %v192 = vld [vmem:[#allocation5 + $0x78] sm:$0xff]
    %v193 = vld [vmem:[%s4] sm:$0x1]
    %v195 = vperm.slane %v193, 0
    %vm199 = vcmask 1041409
    %v200 = vsel %vm199, %v176, %v170
    %202 = vmatpush.msra.mxu0 %v192
    %203 = vmatpush.msra.mxu0 %v191
    %204 = vmatpush.msra.mxu0 %v190
    %205 = vmatpush.msra.mxu0 %v189
    %206 = vmatpush.msra.mxu0 %v188
    %207 = vmatpush.msra.mxu0 %v187
    %208 = vmatpush.msra.mxu0 %v186
    %209 = vmatpush.msra.mxu0 %v185
    %210 = vmatpush.msra.mxu0 %v184
    %211 = vmatpush.msra.mxu0 %v183
    %212 = vmatpush.msra.mxu0 %v182
    %213 = vmatpush.msra.mxu0 %v181
    %214 = vmatpush.msra.mxu0 %v180
    %215 = vmatpush.msra.mxu0 %v179
    %216 = vmatpush.msra.mxu0 %v178
    %217 = vmatpush.msra.mxu0 %v177
    %218 = vmatmul.f32.gmra.mxu0 %v200
    %v219 = vpop.f32.mrf.mxu0
    %v220 = vadd.f32 %v195, %v219
    %221 = vdwg.mxu0
    %v222 = vmax.f32 %v220, 0.0
    %v223 = vld [vmem:[#allocation7] sm:$0xff]
    %v224 = vld [vmem:[#allocation7 + $0x8] sm:$0xff]
    %v225 = vld [vmem:[#allocation7 + $0x10] sm:$0xff]
    %v226 = vld [vmem:[#allocation7 + $0x18] sm:$0xff]
    %v227 = vld [vmem:[#allocation7 + $0x20] sm:$0xff]
    %v228 = vld [vmem:[#allocation7 + $0x28] sm:$0xff]
    %v229 = vld [vmem:[#allocation7 + $0x30] sm:$0xff]
    %v230 = vld [vmem:[#allocation7 + $0x38] sm:$0xff]
    %v231 = vld [vmem:[#allocation7 + $0x40] sm:$0xff]
    %v232 = vld [vmem:[#allocation7 + $0x48] sm:$0xff]
    %v233 = vld [vmem:[#allocation7 + $0x50] sm:$0xff]
    %v234 = vld [vmem:[#allocation7 + $0x58] sm:$0xff]
    %v235 = vld [vmem:[#allocation7 + $0x60] sm:$0xff]
    %v236 = vld [vmem:[#allocation7 + $0x68] sm:$0xff]
    %v237 = vld [vmem:[#allocation7 + $0x70] sm:$0xff]
    %v238 = vld [vmem:[#allocation7 + $0x78] sm:$0xff]
    %v239 = vld [vmem:[%s6] sm:$0x1]
    %v241 = vperm.slane %v239, 0
    %243 = vmatpush.msra.mxu0 %v238
    %244 = vmatpush.msra.mxu0 %v237
    %245 = vmatpush.msra.mxu0 %v236
    %246 = vmatpush.msra.mxu0 %v235
    %247 = vmatpush.msra.mxu0 %v234
    %248 = vmatpush.msra.mxu0 %v233
    %249 = vmatpush.msra.mxu0 %v232
    %250 = vmatpush.msra.mxu0 %v231
    %251 = vmatpush.msra.mxu0 %v230
    %252 = vmatpush.msra.mxu0 %v229
    %253 = vmatpush.msra.mxu0 %v228
    %254 = vmatpush.msra.mxu0 %v227
    %255 = vmatpush.msra.mxu0 %v226
    %256 = vmatpush.msra.mxu0 %v225
    %257 = vmatpush.msra.mxu0 %v224
    %258 = vmatpush.msra.mxu0 %v223
    %259 = vmatmul.f32.gmra.mxu0 %v222
    %v260 = vpop.f32.mrf.mxu0
    %v261 = vadd.f32 %v241, %v260
    %262 = vdwg.mxu0
    %263 = vst [vmem:[#allocation8] sm:$0x3] %v261
    // Predicated region
    $region42: #{tpu_custom_call.1} parent=1 // pred_check
      _
    $region43: #{tpu_custom_call.1} parent=1 // pred_check_branch
      %265 = sbr.rel (0) target = $region45
    $region44: #{tpu_custom_call.1} parent=1 // pred_region
      %267 = vsyncadd [#allocation4], 0
      %s269 = sshll.u32 [#allocation8], 4
      %s270 = int_to_ptr.vmem [resolvable:$true] %s269
      %s271 = sshll.u32 %s7, 4
      %s272 = int_to_ptr.hbm [resolvable:$true] %s271
      %274 = dma.vmem_to_hbm [thread:$0]  %s270, 32, %s272, [#allocation4]
    $region45: #{tpu_custom_call.1} parent=1 // pred_fallthru
      _
    // Predicated region
    $region46: #{tpu_custom_call.1} parent=1 // pred_check
      _
    $region47: #{tpu_custom_call.1} parent=1 // pred_check_branch
      %276 = sbr.rel (0) target = $region49
    $region48: #{tpu_custom_call.1} parent=1 // pred_region
      %278 = dma.done [#allocation4], 32
    $region49: #{tpu_custom_call.1} parent=1 // pred_fallthru
      _
    %279 = vsyncpa [#allocation3], 1
    %280 = vsyncpa [#allocation6], 1
    %281 = vsyncpa [#allocation4], 1

</llo_original>
